<compile_context>
chip_gen: v7x
topology: tpu7x:2x2x1
jax: 0.10.0
libtpu: 0.0.40
codegen_flags: <defaults>
</compile_context>

<pallas_src>
import jax
import jax.numpy as jnp
from jax.experimental import pallas as pl
from jax.experimental.pallas import tpu as pltpu

_LANES = 128
# 8192 rows * 128 lanes * 4 B = 4 MiB per tile buffer. With double-buffered
# input + double-buffered output (~16 MiB) this needs the scoped-VMEM limit
# raised on v5e; 48 MiB is safe on v5e/v6e (128 MiB phys) and v7x (64 MiB).
_ROW_TILE = 8192
_VMEM_LIMIT_BYTES = 48 << 20
# Below this the op is 100% launch overhead: use fused XLA elementwise.
_SMALL_BYTES = 512 * 1024


def _affine_kernel(x_ref, o_ref):
    x = x_ref[...]
    # ((x + 2) * 3 - 5) / 2 ; dividing by 2 == multiplying by 0.5 exactly.
    o_ref[...] = ((x + 2.0) * 3.0 - 5.0) * 0.5


def _call_single_block(x2):
    # Small slab (<= one tile): whole array as one VMEM block. block_shape
    # equals the full array dims, so the (8,128) rule is satisfied.
    return pl.pallas_call(
        _affine_kernel,
        out_shape=jax.ShapeDtypeStruct(x2.shape, x2.dtype),
        in_specs=[pl.BlockSpec(x2.shape, lambda: (0, 0))],
        out_specs=pl.BlockSpec(x2.shape, lambda: (0, 0)),
    )(x2)


def _call_tiled(x2):
    rows, _ = x2.shape
    return pl.pallas_call(
        _affine_kernel,
        out_shape=jax.ShapeDtypeStruct(x2.shape, x2.dtype),
        grid=(pl.cdiv(rows, _ROW_TILE),),  # ragged last block handled by Pallas
        in_specs=[pl.BlockSpec((_ROW_TILE, _LANES), lambda i: (i, 0))],
        out_specs=pl.BlockSpec((_ROW_TILE, _LANES), lambda i: (i, 0)),
        compiler_params=pltpu.CompilerParams(
            dimension_semantics=("parallel",),  # megacore sharding on v7x
            vmem_limit_bytes=_VMEM_LIMIT_BYTES,
        ),
    )(x2)


def pt_module_forward(x, *, force_pallas=False):
    """y = ((x + 2) * 3 - 5) / 2, lane-dense Pallas path for large inputs."""
    total = x.size
    if not force_pallas and total * x.dtype.itemsize <= _SMALL_BYTES:
        # Tiny input: a Pallas launch is pure overhead; let XLA fuse it.
        return ((x + 2.0) * 3.0 - 5.0) / 2.0

    orig_shape = x.shape
    flat = x.reshape(-1)

    # Pad (only if needed) so the slab is lane-dense: full-width, unmasked
    # vector loads/stores instead of masked sub-128 partial stores.
    pad = (-total) % _LANES
    if pad:
        flat = jnp.pad(flat, (0, pad))

    rows = flat.size // _LANES
    x2 = flat.reshape(rows, _LANES)

    if rows > _ROW_TILE:
        out2 = _call_tiled(x2)
    else:
        out2 = _call_single_block(x2)

    out_flat = out2.reshape(-1)
    if pad:
        out_flat = out_flat[:total]
    return out_flat.reshape(orig_shape)


def _reference(x):
    return ((x + 2.0) * 3.0 - 5.0) / 2.0


if __name__ == "__main__":
    key = jax.random.PRNGKey(0)

    # Spec shape (2, 4, 16, 16): default fast path AND forced Pallas path.
    x = jax.random.normal(key, (2, 4, 16, 16), dtype=jnp.float32)
    ref = _reference(x)

    out_fast = pt_module_forward(x)
    out_pallas = pt_module_forward(x, force_pallas=True)
    jax.block_until_ready((out_fast, out_pallas))
    assert out_fast.shape == ref.shape and out_fast.dtype == ref.dtype
    assert out_pallas.shape == ref.shape and out_pallas.dtype == ref.dtype
    assert jnp.allclose(out_fast, ref, atol=1e-6, rtol=1e-6)
    assert jnp.allclose(out_pallas, ref, atol=1e-6, rtol=1e-6)

    # Larger lane-dense slab with a non-divisible row count: exercises the
    # cdiv-tiled, double-buffered, megacore-parallel path (grid = 3).
    k1, k2 = jax.random.split(key)
    x_big = jax.random.normal(k1, (16400, 128), dtype=jnp.float32)
    out_big = pt_module_forward(x_big)
    jax.block_until_ready(out_big)
    assert jnp.allclose(out_big, _reference(x_big), atol=1e-6, rtol=1e-6)

    # Total not a multiple of 128: exercises the pad -> lane-dense fallback.
    x_odd = jax.random.normal(k2, (3, 7, 11, 5), dtype=jnp.float32)
    out_odd = pt_module_forward(x_odd, force_pallas=True)
    jax.block_until_ready(out_odd)
    assert out_odd.shape == x_odd.shape
    assert jnp.allclose(out_odd, _reference(x_odd), atol=1e-6, rtol=1e-6)

    print("KERNEL_OK")
</pallas_src>

<mosaic_0001>
module attributes {stable_mosaic.version = 11 : i64} {
  func.func @_affine_kernel(%arg0: memref<16x128xf32, #tpu.memory_space<vmem>>, %arg1: memref<16x128xf32, #tpu.memory_space<vmem>>) attributes {dimension_semantics = [], scalar_prefetch = 0 : i64, scratch_operands = 0 : i64, tpu.core_type = #tpu.core_type<tc>} {
    %c0 = arith.constant 0 : index
    %c0_0 = arith.constant 0 : index
    %0 = vector.load %arg0[%c0, %c0_0] : memref<16x128xf32, #tpu.memory_space<vmem>>, vector<16x128xf32>
    %cst = arith.constant 2.000000e+00 : f32
    %1 = vector.broadcast %cst : f32 to vector<16x128xf32>
    %2 = arith.addf %0, %1 : vector<16x128xf32>
    %cst_1 = arith.constant 3.000000e+00 : f32
    %3 = vector.broadcast %cst_1 : f32 to vector<16x128xf32>
    %4 = arith.mulf %2, %3 : vector<16x128xf32>
    %cst_2 = arith.constant 5.000000e+00 : f32
    %5 = vector.broadcast %cst_2 : f32 to vector<16x128xf32>
    %6 = arith.subf %4, %5 : vector<16x128xf32>
    %cst_3 = arith.constant 5.000000e-01 : f32
    %7 = vector.broadcast %cst_3 : f32 to vector<16x128xf32>
    %8 = arith.mulf %6, %7 : vector<16x128xf32>
    %c0_4 = arith.constant 0 : index
    %c0_5 = arith.constant 0 : index
    %9 = vector.load %arg1[%c0_4, %c0_5] : memref<16x128xf32, #tpu.memory_space<vmem>>, vector<16x128xf32>
    tpu.vector_store %arg1[%c0_4, %c0_5], %8 {strides = array<i32>} : memref<16x128xf32, #tpu.memory_space<vmem>>, vector<16x128xf32>,
    return
  }
}

</mosaic_0001>

<llo_original>
// kernel: tpu_custom_call.1
$region0: #{tpu_custom_call.1}
  #allocation0 [shape = 'u32[]', space=smem, size = 0x4, offset = 0x4, fixed_abs, tag = 'smem constant byte address 0x4 - core index']
  #allocation1 [shape = 'u32[144,128]{1,0:T(1,128)}', space=vmem, size = 0x12000, scoped, tag = 'internal scratch']
  %s0 = inlined_call_operand.hbm [shape: f32[16,128], index: 0, kind: input, shape index: {}]
  %s1 = inlined_call_operand.hbm [shape: f32[16,128], index: 1, kind: output, shape index: {}]
  %s2 = sld [smem:[#allocation0]]
  $region18: #{tpu_custom_call.1} parent=0
    _
  %s4 = ssub.s32 1, %s2
  %s5 = scalar_select 0, %s4, %s2
  $region1: #{tpu_custom_call.1} parent=0
    #allocation2 [shape = 'u8[8192]{0}', space=vmem, size = 0x2000, scoped, tag = 'input window, operand 0, single buffered']
    #allocation3 [shape = 's32[1]{0}', space=sflag, size = 0x4, scoped, tag = 'scoped memory for tpu_custom_call.1']
    #allocation4 [shape = 's32[1]{0}', space=sflag, size = 0x4, scoped, tag = 'scoped memory for tpu_custom_call.1']
    #allocation5 [shape = 'u8[8192]{0}', space=vmem, size = 0x2000, scoped, tag = 'output window, operand 0, single buffered']
    %6 = vsyncpa [#allocation3], 0
    %7 = vsyncpa [#allocation4], 0
    // Predicated region
    $region2: #{tpu_custom_call.1} parent=1 // pred_check
      _
    $region3: #{tpu_custom_call.1} parent=1 // pred_check_branch
      %9 = sbr.rel (0) target = $region5
    $region4: #{tpu_custom_call.1} parent=1 // pred_region
      %s11 = ssub.s32 256, 256
      %12 = vsyncadd [#allocation3], %s11
      %s13 = sshll.u32 [#allocation2], 4
      %s14 = int_to_ptr.vmem [resolvable:$true] %s13
      %19 = dma.hbm_to_vmem [thread:$0]  %s0, 256, %s14, [#allocation3], 128, 128, 8
    $region5: #{tpu_custom_call.1} parent=1 // pred_fallthru
      _
    // Predicated region
    $region6: #{tpu_custom_call.1} parent=1 // pred_check
      _
    $region7: #{tpu_custom_call.1} parent=1 // pred_check_branch
      %21 = sbr.rel (0) target = $region9
    $region8: #{tpu_custom_call.1} parent=1 // pred_region
      %22 = dma.done [#allocation3], 256
    $region9: #{tpu_custom_call.1} parent=1 // pred_fallthru
      _
    %v23 = vld [vmem:[#allocation2] sm:$0xff]
    %v24 = vld [vmem:[#allocation2 + $0x8] sm:$0xff]
    %v25 = vadd.f32 %v23, 2.0
    %v26 = vadd.f32 %v24, 2.0
    %v27 = vmul.f32 %v25, 3.0
    %v28 = vmul.f32 %v26, 3.0
    %v29 = vsub.f32 %v27, 5.0
    %v30 = vsub.f32 %v28, 5.0
    %v31 = vmul.f32 %v29, 0.5
    %v32 = vmul.f32 %v30, 0.5
    %33 = vst [vmem:[#allocation5] sm:$0xff] %v31
    %34 = vst [vmem:[#allocation5 + $0x8] sm:$0xff] %v32
    // Predicated region
    $region10: #{tpu_custom_call.1} parent=1 // pred_check
      _
    $region11: #{tpu_custom_call.1} parent=1 // pred_check_branch
      %36 = sbr.rel (0) target = $region13
    $region12: #{tpu_custom_call.1} parent=1 // pred_region
      %s38 = ssub.s32 256, 256
      %39 = vsyncadd [#allocation4], %s38
      %s40 = sshll.u32 [#allocation5], 4
      %s41 = int_to_ptr.vmem [resolvable:$true] %s40
      %46 = dma.vmem_to_hbm [thread:$0]  %s41, 256, %s1, [#allocation4], 128, 128, 8
    $region13: #{tpu_custom_call.1} parent=1 // pred_fallthru
      _
    // Predicated region
    $region14: #{tpu_custom_call.1} parent=1 // pred_check
      _
    $region15: #{tpu_custom_call.1} parent=1 // pred_check_branch
      %48 = sbr.rel (0) target = $region17
    $region16: #{tpu_custom_call.1} parent=1 // pred_region
      %49 = dma.done [#allocation4], 256
    $region17: #{tpu_custom_call.1} parent=1 // pred_fallthru
      _
    %50 = vsyncpa [#allocation3], 1
    %51 = vsyncpa [#allocation4], 1

</llo_original>
